<compile_context>
chip_gen: v6e
topology: v6e:2x2x1
jax: 0.10.0
libtpu: 0.0.40
codegen_flags: <defaults>
</compile_context>

<pallas_src>
import jax
import jax.numpy as jnp
from jax import lax
from jax.experimental import pallas as pl
from jax.experimental.pallas import tpu as pltpu


def edge_decoder_kernel(zu_ref, zm_ref, w1a_ref, w1b_ref, b1_ref, w2_ref,
                        b2_ref, o_ref):
    # zu_ref, zm_ref : [TILE_E, H] bf16   (gathered user / movie embeddings)
    # w1a_ref, w1b_ref : [H, H] bf16      (untransposed halves of W1)
    # b1_ref : [H, 1] f32   w2_ref : [1, H] f32   b2_ref : SMEM (1,) f32
    # o_ref : [1, TILE_E] f32             (lane-dense output row)

    # hT[h, e] = sum_k W1[h, k] * zu[e, k]  +  sum_k W1[h, H+k] * zm[e, k]
    hT = lax.dot_general(
        w1a_ref[...], zu_ref[...],
        dimension_numbers=(((1,), (1,)), ((), ())),
        preferred_element_type=jnp.float32,
    )  # [H, TILE_E]
    hT = hT + lax.dot_general(
        w1b_ref[...], zm_ref[...],
        dimension_numbers=(((1,), (1,)), ((), ())),
        preferred_element_type=jnp.float32,
    )
    hT = jnp.maximum(hT + b1_ref[...], 0.0)  # ReLU on dense [H, TILE_E] vregs

    # Second layer: [1, H] @ [H, TILE_E] -> lane-dense [1, TILE_E].
    out = lax.dot_general(
        w2_ref[...], hT,
        dimension_numbers=(((1,), (0,)), ((), ())),
        preferred_element_type=jnp.float32,
    )
    o_ref[...] = (out + b2_ref[0]).astype(o_ref.dtype)


def _round_up(x, m):
    return ((x + m - 1) // m) * m


def edge_decoder_forward(z_user, z_movie, edge_label_index, w1, b1, w2, b2,
                         *, tile_e=4096):
    """z_user: [Nu, H], z_movie: [Nm, H], edge_label_index: [2, E] int32.

    w1: [H, 2H] (PyTorch layout), b1: [H], w2: [1, H], b2: [1].
    Returns: [E] float32.
    """
    row, col = edge_label_index[0], edge_label_index[1]
    H = z_user.shape[-1]
    E = row.shape[0]

    # Clamp the tile so small E doesn't over-pad and (on v7x) there are at
    # least two parallel tiles to shard across the two TensorCores.
    tile_e = max(128, min(tile_e, _round_up(pl.cdiv(E, 2), 128)))
    num_tiles = pl.cdiv(E, tile_e)
    e_pad = num_tiles * tile_e

    # Pad the cheap int32 index vectors (with index 0) instead of padding the
    # gathered [E, H] tensors; the gather then emits already-padded outputs.
    if e_pad != E:
        pad = e_pad - E
        row = jnp.pad(row, (0, pad))
        col = jnp.pad(col, (0, pad))

    # Gather (glue, XLA) in bf16 to halve HBM traffic of the dominant stream.
    # TODO(synk): move the gather into the kernel (VMEM-resident projection
    # tables + scalar-prefetched indices) to eliminate this HBM round trip.
    zu = z_user.astype(jnp.bfloat16)[row]    # [e_pad, H]
    zm = z_movie.astype(jnp.bfloat16)[col]   # [e_pad, H]

    # W1 halves, untransposed (the kernel contracts their last dim with the
    # last dim of the gathered tiles -> transposed, lane-dense dataflow).
    w1a = w1[:, :H].astype(jnp.bfloat16)           # [H, H] acts on z_user
    w1b = w1[:, H:].astype(jnp.bfloat16)           # [H, H] acts on z_movie
    b1_c = b1.reshape(H, 1).astype(jnp.float32)    # [H, 1] column
    w2_r = w2.reshape(1, H).astype(jnp.float32)    # [1, H]
    b2_s = b2.reshape(1).astype(jnp.float32)       # scalar, lives in SMEM

    out = pl.pallas_call(
        edge_decoder_kernel,
        out_shape=jax.ShapeDtypeStruct((1, e_pad), jnp.float32),
        grid_spec=pltpu.PrefetchScalarGridSpec(
            num_scalar_prefetch=0,
            grid=(num_tiles,),
            in_specs=[
                pl.BlockSpec((tile_e, H), lambda i: (i, 0)),   # zu tile
                pl.BlockSpec((tile_e, H), lambda i: (i, 0)),   # zm tile
                pl.BlockSpec((H, H), lambda i: (0, 0)),        # w1a (resident)
                pl.BlockSpec((H, H), lambda i: (0, 0)),        # w1b (resident)
                pl.BlockSpec((H, 1), lambda i: (0, 0)),        # b1  (resident)
                pl.BlockSpec((1, H), lambda i: (0, 0)),        # w2  (resident)
                pl.BlockSpec(memory_space=pltpu.MemorySpace.SMEM),  # b2 scalar
            ],
            out_specs=pl.BlockSpec((1, tile_e), lambda i: (0, i)),  # lane-dense
        ),
        compiler_params=pltpu.CompilerParams(
            dimension_semantics=("parallel",),
            vmem_limit_bytes=48 * 1024 * 1024,
        ),
    )(zu, zm, w1a, w1b, b1_c, w2_r, b2_s)

    return out.reshape(-1)[:E]  # == z.view(-1)


def reference_forward(z_user, z_movie, edge_label_index, w1, b1, w2, b2):
    row, col = edge_label_index[0], edge_label_index[1]
    z = jnp.concatenate([z_user[row], z_movie[col]], axis=-1)
    z = jnp.maximum(z @ w1.T + b1, 0.0)
    z = z @ w2.T + b2
    return z.reshape(-1)


if __name__ == "__main__":
    key = jax.random.PRNGKey(0)
    k_u, k_m, k_r, k_c, k_w1, k_b1, k_w2, k_b2 = jax.random.split(key, 8)

    hidden = 32          # hidden_channels
    num_users = 64
    num_movies = 96
    num_edges = 1000     # not a multiple of TILE_E -> exercises grid + padding

    z_user = jax.random.normal(k_u, (num_users, hidden), dtype=jnp.float32)
    z_movie = jax.random.normal(k_m, (num_movies, hidden), dtype=jnp.float32)
    row = jax.random.randint(k_r, (num_edges,), 0, num_users, dtype=jnp.int32)
    col = jax.random.randint(k_c, (num_edges,), 0, num_movies, dtype=jnp.int32)
    edge_label_index = jnp.stack([row, col], axis=0)  # [2, E]

    # Deterministic parameter init (Linear(2H, H) and Linear(H, 1) shapes).
    w1 = jax.random.normal(k_w1, (hidden, 2 * hidden), dtype=jnp.float32) * 0.1
    b1 = jax.random.normal(k_b1, (hidden,), dtype=jnp.float32) * 0.1
    w2 = jax.random.normal(k_w2, (1, hidden), dtype=jnp.float32) * 0.1
    b2 = jax.random.normal(k_b2, (1,), dtype=jnp.float32) * 0.1

    out = edge_decoder_forward(z_user, z_movie, edge_label_index,
                               w1, b1, w2, b2)
    out = jax.block_until_ready(out)

    ref = reference_forward(z_user, z_movie, edge_label_index, w1, b1, w2, b2)
    assert out.shape == (num_edges,)
    # bf16 inputs (f32 accumulation) -> slightly looser tolerance vs f32 ref.
    assert jnp.allclose(out, ref, atol=5e-2, rtol=5e-2)

    print("KERNEL_OK")
</pallas_src>

<mosaic_0001>
module attributes {stable_mosaic.version = 11 : i64} {
  func.func @edge_decoder_kernel(%arg0: i32, %arg1: memref<512x32xbf16, #tpu.memory_space<vmem>>, %arg2: memref<512x32xbf16, #tpu.memory_space<vmem>>, %arg3: memref<32x32xbf16, #tpu.memory_space<vmem>>, %arg4: memref<32x32xbf16, #tpu.memory_space<vmem>>, %arg5: memref<32x1xf32, #tpu.memory_space<vmem>>, %arg6: memref<1x32xf32, #tpu.memory_space<vmem>>, %arg7: memref<1xf32, #tpu.memory_space<smem>>, %arg8: memref<1x512xf32, #tpu.memory_space<vmem>>) attributes {dimension_semantics = [#tpu.dimension_semantics<parallel>], iteration_bounds = array<i64: 2>, scalar_prefetch = 0 : i64, scratch_operands = 0 : i64, tpu.core_type = #tpu.core_type<tc>, window_params = [{transform_indices = @transform_0, window_bounds = array<i64: 512, 32>}, {transform_indices = @transform_1, window_bounds = array<i64: 512, 32>}, {pipeline_mode = #tpu.pipeline_mode<synchronous>, transform_indices = @transform_2, window_bounds = array<i64: 32, 32>}, {pipeline_mode = #tpu.pipeline_mode<synchronous>, transform_indices = @transform_3, window_bounds = array<i64: 32, 32>}, {pipeline_mode = #tpu.pipeline_mode<synchronous>, transform_indices = @transform_4, window_bounds = array<i64: 32, 1>}, {pipeline_mode = #tpu.pipeline_mode<synchronous>, transform_indices = @transform_5, window_bounds = array<i64: 1, 32>}, {transform_indices = @transform_6, window_bounds = array<i64: 1>}, {transform_indices = @transform_7, window_bounds = array<i64: 1, 512>}]} {
    %c0 = arith.constant 0 : index
    %c0_0 = arith.constant 0 : index
    %0 = vector.load %arg3[%c0, %c0_0] : memref<32x32xbf16, #tpu.memory_space<vmem>>, vector<32x32xbf16>
    %c0_1 = arith.constant 0 : index
    %c0_2 = arith.constant 0 : index
    %1 = vector.load %arg1[%c0_1, %c0_2] : memref<512x32xbf16, #tpu.memory_space<vmem>>, vector<512x32xbf16>
    %cst = arith.constant dense<0.000000e+00> : vector<32x512xf32>
    %2 = tpu.matmul %0, %1, %cst {dimension_numbers = #tpu.dot_dimension_numbers<[1], [1], [0], [0], [0, 0, 1, 0], [], []>} : vector<32x32xbf16>, vector<512x32xbf16>, vector<32x512xf32> -> vector<32x512xf32>
    %c0_3 = arith.constant 0 : index
    %c0_4 = arith.constant 0 : index
    %3 = vector.load %arg4[%c0_3, %c0_4] : memref<32x32xbf16, #tpu.memory_space<vmem>>, vector<32x32xbf16>
    %c0_5 = arith.constant 0 : index
    %c0_6 = arith.constant 0 : index
    %4 = vector.load %arg2[%c0_5, %c0_6] : memref<512x32xbf16, #tpu.memory_space<vmem>>, vector<512x32xbf16>
    %cst_7 = arith.constant dense<0.000000e+00> : vector<32x512xf32>
    %5 = tpu.matmul %3, %4, %cst_7 {dimension_numbers = #tpu.dot_dimension_numbers<[1], [1], [0], [0], [0, 0, 1, 0], [], []>} : vector<32x32xbf16>, vector<512x32xbf16>, vector<32x512xf32> -> vector<32x512xf32>
    %6 = arith.addf %2, %5 : vector<32x512xf32>
    %c0_8 = arith.constant 0 : index
    %c0_9 = arith.constant 0 : index
    %7 = vector.load %arg5[%c0_8, %c0_9] : memref<32x1xf32, #tpu.memory_space<vmem>>, vector<32x1xf32>
    %8 = vector.broadcast %7 : vector<32x1xf32> to vector<32x512xf32>
    %9 = arith.addf %6, %8 : vector<32x512xf32>
    %cst_10 = arith.constant 0.000000e+00 : f32
    %10 = vector.broadcast %cst_10 : f32 to vector<32x512xf32>
    %11 = arith.maximumf %9, %10 : vector<32x512xf32>
    %c0_11 = arith.constant 0 : index
    %c0_12 = arith.constant 0 : index
    %12 = vector.load %arg6[%c0_11, %c0_12] : memref<1x32xf32, #tpu.memory_space<vmem>>, vector<1x32xf32>
    %cst_13 = arith.constant dense<0.000000e+00> : vector<1x512xf32>
    %13 = tpu.matmul %12, %11, %cst_13 {dimension_numbers = #tpu.dot_dimension_numbers<[1], [0], [0], [1], [0, 0, 1, 1], [], []>} : vector<1x32xf32>, vector<32x512xf32>, vector<1x512xf32> -> vector<1x512xf32>
    %c0_14 = arith.constant 0 : index
    %14 = memref.load %arg7[%c0_14] : memref<1xf32, #tpu.memory_space<smem>>
    %15 = vector.broadcast %14 : f32 to vector<1x512xf32>
    %16 = arith.addf %13, %15 : vector<1x512xf32>
    %c0_15 = arith.constant 0 : index
    %c0_16 = arith.constant 0 : index
    %17 = vector.load %arg8[%c0_15, %c0_16] : memref<1x512xf32, #tpu.memory_space<vmem>>, vector<1x512xf32>
    tpu.vector_store %arg8[%c0_15, %c0_16], %16 {strides = array<i32>} : memref<1x512xf32, #tpu.memory_space<vmem>>, vector<1x512xf32>,
    return
  }
  func.func @transform_0(%arg0: i32) -> (i32, i32) {
    %c0_i32 = arith.constant 0 : i32
    %c0_i32_0 = arith.constant 0 : i32
    return %arg0, %c0_i32 : i32, i32
  }
  func.func @transform_1(%arg0: i32) -> (i32, i32) {
    %c0_i32 = arith.constant 0 : i32
    %c0_i32_0 = arith.constant 0 : i32
    return %arg0, %c0_i32 : i32, i32
  }
  func.func @transform_2(%arg0: i32) -> (i32, i32) {
    %c0_i32 = arith.constant 0 : i32
    %c0_i32_0 = arith.constant 0 : i32
    %c0_i32_1 = arith.constant 0 : i32
    return %c0_i32, %c0_i32_0 : i32, i32
  }
  func.func @transform_3(%arg0: i32) -> (i32, i32) {
    %c0_i32 = arith.constant 0 : i32
    %c0_i32_0 = arith.constant 0 : i32
    %c0_i32_1 = arith.constant 0 : i32
    return %c0_i32, %c0_i32_0 : i32, i32
  }
  func.func @transform_4(%arg0: i32) -> (i32, i32) {
    %c0_i32 = arith.constant 0 : i32
    %c0_i32_0 = arith.constant 0 : i32
    %c0_i32_1 = arith.constant 0 : i32
    return %c0_i32, %c0_i32_0 : i32, i32
  }
  func.func @transform_5(%arg0: i32) -> (i32, i32) {
    %c0_i32 = arith.constant 0 : i32
    %c0_i32_0 = arith.constant 0 : i32
    %c0_i32_1 = arith.constant 0 : i32
    return %c0_i32, %c0_i32_0 : i32, i32
  }
  func.func @transform_6(%arg0: i32) -> i32 {
    %c0_i32 = arith.constant 0 : i32
    %c0_i32_0 = arith.constant 0 : i32
    return %c0_i32 : i32
  }
  func.func @transform_7(%arg0: i32) -> (i32, i32) {
    %c0_i32 = arith.constant 0 : i32
    %c0_i32_0 = arith.constant 0 : i32
    return %c0_i32, %arg0 : i32, i32
  }
}

</mosaic_0001>

<llo_original>
// kernel: tpu_custom_call.1
$region0: #{tpu_custom_call.1}
  #allocation0 [shape = 'u32[]', space=smem, size = 0x4, offset = 0x4, fixed_abs, tag = 'smem constant byte address 0x4 - core index']
  #allocation1 [shape = 'u32[144,128]{1,0:T(1,128)}', space=vmem, size = 0x12000, scoped, tag = 'internal scratch']
  #allocation2 [shape = 'f32[1]{0:T(128)S(6)}', space=smem, size = 0x200, scoped, tag = 'scoped memory for tpu_custom_call.1']
  %s0 = inlined_call_operand.vmem [shape: bf16[1024,32], index: 0, kind: input, shape index: {}]
  %s1 = inlined_call_operand.vmem [shape: bf16[1024,32], index: 1, kind: input, shape index: {}]
  %s2 = inlined_call_operand.vmem [shape: bf16[32,32], index: 2, kind: input, shape index: {}]
  %s3 = inlined_call_operand.vmem [shape: bf16[32,32], index: 3, kind: input, shape index: {}]
  %s4 = inlined_call_operand.vmem [shape: f32[32,1], index: 4, kind: input, shape index: {}]
  %s5 = inlined_call_operand.vmem [shape: f32[1,32], index: 5, kind: input, shape index: {}]
  %s6 = inlined_call_operand.<no memory space> [shape: f32[1], index: 6, kind: input, shape index: {}]
  %s7 = inlined_call_operand.hbm [shape: f32[1,1024], index: 7, kind: output, shape index: {}]
  %s8 = sld [smem:[#allocation0]]
  $region61: #{tpu_custom_call.1} parent=0
    _
  %s10 = ssub.s32 1, %s8
  %s11 = scalar_select 0, %s10, %s8
  %12 = sst [smem:[#allocation2]] %s6
  $region1: #{tpu_custom_call.1} parent=0
    #allocation3 [shape = 'u8[4096]{0}', space=vmem, size = 0x1000, scoped, tag = 'output window, operand 0']
    #allocation4 [shape = 's32[2]{0}', space=sflag, size = 0x8, scoped, tag = 'scoped memory for tpu_custom_call.1']
    %13 = vsyncpa [#allocation4], 0
    %s14 = scalar_lea.sflag [#allocation4], 1
    %15 = vsyncpa %s14, 0
    loop: start=0, step=1, limit=4
    $region2: #{tpu_custom_call.1} parent=1 // loop_pre_header
      _
    $region3: #{tpu_custom_call.1} parent=1 // loop_header
      %s17 = sphi 0, %s21
      %p18 = scmp.ge.s32.totalorder %s17, 4
      %s27 = sphi 0, %s29
      %s30 = sphi 0, %s27
      %s31 = sphi 0, %s30
      %s47 = sphi 0, %s31
      %s53 = sphi 0, %s55
      %s56 = sphi 0, %s53
      %s57 = sphi 0, %s56
      %s73 = sphi 0, %s57
      %s77 = sphi 0, %s77
      %s79 = sphi 0, %s77
      %s80 = sphi 0, %s79
      %s94 = sphi 0, %s80
      %s98 = sphi 0, %s98
      %s100 = sphi 0, %s98
      %s101 = sphi 0, %s100
      %s115 = sphi 0, %s101
      %s119 = sphi 0, %s119
      %s121 = sphi 0, %s119
      %s122 = sphi 0, %s121
      %s136 = sphi 0, %s122
      %s140 = sphi 0, %s140
      %s142 = sphi 0, %s140
      %s143 = sphi 0, %s142
      %s157 = sphi 0, %s143
      %s161 = sphi 0, %s161
      %s163 = sphi 0, %s161
      %s164 = sphi 0, %s163
      %s178 = sphi 0, %s164
      %s184 = sphi 0, %s186
      %s187 = sphi 0, %s184
      %s188 = sphi 0, %s187
      %s204 = sphi 0, %s188
    $region4: #{tpu_custom_call.1} parent=1 // loop_header_branch
      %20 = sbr.rel (%p18) target = $region8
    $region5: #{tpu_custom_call.1} parent=1 // loop_body
      %s22 = ssub.s32 %s17, 1
      %s23 = ssub.s32 %s17, 2
      %s24 = sadd.s32 %s17, 1
      %s25 = ssub.s32 %s17, %s24
      %p26 = scmp.eq.s32.totalorder %s25, 0
      %s28 = sadd.s32 %s27, 1
      %s29 = scalar_select %p26, %s27, %s28
      %p32 = pneg %p26
      %p33 = scmp.eq.s32.totalorder %s17, 1
      %p34 = por %p32, %p33
      %p35 = scmp.ne.s32.totalorder %s27, %s30
      %p36 = scmp.eq.s32.totalorder %s17, 0
      %p37 = por %p35, %p36
      %p38 = scmp.ne.s32.totalorder %s27, %s30
      %p39 = scmp.eq.s32.totalorder %s22, 1
      %p40 = por %p38, %p39
      %p41 = scmp.ne.s32.totalorder %s30, %s31
      %p42 = scmp.eq.s32.totalorder %s22, 0
      %p43 = por %p41, %p42
      %p44 = scmp.ne.s32.totalorder %s30, %s31
      %p45 = scmp.eq.s32.totalorder %s23, 1
      %p46 = por %p44, %p45
      %p48 = scmp.ne.s32.totalorder %s31, %s47
      %p49 = scmp.eq.s32.totalorder %s23, 0
      %p50 = por %p48, %p49
      %s51 = ssub.s32 %s17, %s24
      %p52 = scmp.eq.s32.totalorder %s51, 0
      %s54 = sadd.s32 %s53, 1
      %s55 = scalar_select %p52, %s53, %s54
      %p58 = pneg %p52
      %p59 = scmp.eq.s32.totalorder %s17, 1
      %p60 = por %p58, %p59
      %p61 = scmp.ne.s32.totalorder %s53, %s56
      %p62 = scmp.eq.s32.totalorder %s17, 0
      %p63 = por %p61, %p62
      %p64 = scmp.ne.s32.totalorder %s53, %s56
      %p65 = scmp.eq.s32.totalorder %s22, 1
      %p66 = por %p64, %p65
      %p67 = scmp.ne.s32.totalorder %s56, %s57
      %p68 = scmp.eq.s32.totalorder %s22, 0
      %p69 = por %p67, %p68
      %p70 = scmp.ne.s32.totalorder %s56, %s57
      %p71 = scmp.eq.s32.totalorder %s23, 1
      %p72 = por %p70, %p71
      %p74 = scmp.ne.s32.totalorder %s57, %s73
      %p75 = scmp.eq.s32.totalorder %s23, 0
      %p76 = por %p74, %p75
      %s78 = sadd.s32 %s77, 1
      %p81 = scmp.eq.s32.totalorder %s17, 1
      %p82 = scmp.ne.s32.totalorder %s77, %s79
      %p83 = scmp.eq.s32.totalorder %s17, 0
      %p84 = por %p82, %p83
      %p85 = scmp.ne.s32.totalorder %s77, %s79
      %p86 = scmp.eq.s32.totalorder %s22, 1
      %p87 = por %p85, %p86
      %p88 = scmp.ne.s32.totalorder %s79, %s80
      %p89 = scmp.eq.s32.totalorder %s22, 0
      %p90 = por %p88, %p89
      %p91 = scmp.ne.s32.totalorder %s79, %s80
      %p92 = scmp.eq.s32.totalorder %s23, 1
      %p93 = por %p91, %p92
      %p95 = scmp.ne.s32.totalorder %s80, %s94
      %p96 = scmp.eq.s32.totalorder %s23, 0
      %p97 = por %p95, %p96
      %s99 = sadd.s32 %s98, 1
      %p102 = scmp.eq.s32.totalorder %s17, 1
      %p103 = scmp.ne.s32.totalorder %s98, %s100
      %p104 = scmp.eq.s32.totalorder %s17, 0
      %p105 = por %p103, %p104
      %p106 = scmp.ne.s32.totalorder %s98, %s100
      %p107 = scmp.eq.s32.totalorder %s22, 1
      %p108 = por %p106, %p107
      %p109 = scmp.ne.s32.totalorder %s100, %s101
      %p110 = scmp.eq.s32.totalorder %s22, 0
      %p111 = por %p109, %p110
      %p112 = scmp.ne.s32.totalorder %s100, %s101
      %p113 = scmp.eq.s32.totalorder %s23, 1
      %p114 = por %p112, %p113
      %p116 = scmp.ne.s32.totalorder %s101, %s115
      %p117 = scmp.eq.s32.totalorder %s23, 0
      %p118 = por %p116, %p117
      %s120 = sadd.s32 %s119, 1
      %p123 = scmp.eq.s32.totalorder %s17, 1
      %p124 = scmp.ne.s32.totalorder %s119, %s121
      %p125 = scmp.eq.s32.totalorder %s17, 0
      %p126 = por %p124, %p125
      %p127 = scmp.ne.s32.totalorder %s119, %s121
      %p128 = scmp.eq.s32.totalorder %s22, 1
      %p129 = por %p127, %p128
      %p130 = scmp.ne.s32.totalorder %s121, %s122
      %p131 = scmp.eq.s32.totalorder %s22, 0
      %p132 = por %p130, %p131
      %p133 = scmp.ne.s32.totalorder %s121, %s122
      %p134 = scmp.eq.s32.totalorder %s23, 1
      %p135 = por %p133, %p134
      %p137 = scmp.ne.s32.totalorder %s122, %s136
      %p138 = scmp.eq.s32.totalorder %s23, 0
      %p139 = por %p137, %p138
      %s141 = sadd.s32 %s140, 1
      %p144 = scmp.eq.s32.totalorder %s17, 1
      %p145 = scmp.ne.s32.totalorder %s140, %s142
      %p146 = scmp.eq.s32.totalorder %s17, 0
      %p147 = por %p145, %p146
      %p148 = scmp.ne.s32.totalorder %s140, %s142
      %p149 = scmp.eq.s32.totalorder %s22, 1
      %p150 = por %p148, %p149
      %p151 = scmp.ne.s32.totalorder %s142, %s143
      %p152 = scmp.eq.s32.totalorder %s22, 0
      %p153 = por %p151, %p152
      %p154 = scmp.ne.s32.totalorder %s142, %s143
      %p155 = scmp.eq.s32.totalorder %s23, 1
      %p156 = por %p154, %p155
      %p158 = scmp.ne.s32.totalorder %s143, %s157
      %p159 = scmp.eq.s32.totalorder %s23, 0
      %p160 = por %p158, %p159
      %s162 = sadd.s32 %s161, 1
      %p165 = scmp.eq.s32.totalorder %s17, 1
      %p166 = scmp.ne.s32.totalorder %s161, %s163
      %p167 = scmp.eq.s32.totalorder %s17, 0
      %p168 = por %p166, %p167
      %p169 = scmp.ne.s32.totalorder %s161, %s163
      %p170 = scmp.eq.s32.totalorder %s22, 1
      %p171 = por %p169, %p170
      %p172 = scmp.ne.s32.totalorder %s163, %s164
      %p173 = scmp.eq.s32.totalorder %s22, 0
      %p174 = por %p172, %p173
      %p175 = scmp.ne.s32.totalorder %s163, %s164
      %p176 = scmp.eq.s32.totalorder %s23, 1
      %p177 = por %p175, %p176
      %p179 = scmp.ne.s32.totalorder %s164, %s178
      %p180 = scmp.eq.s32.totalorder %s23, 0
      %p181 = por %p179, %p180
      %s182 = ssub.s32 %s17, %s24
      %p183 = scmp.eq.s32.totalorder %s182, 0
      %s185 = sadd.s32 %s184, 1
      %s186 = scalar_select %p183, %s184, %s185
      %p189 = pneg %p183
      %p190 = scmp.eq.s32.totalorder %s17, 1
      %p191 = por %p189, %p190
      %p192 = scmp.ne.s32.totalorder %s184, %s187
      %p193 = scmp.eq.s32.totalorder %s17, 0
      %p194 = por %p192, %p193
      %p195 = scmp.ne.s32.totalorder %s184, %s187
      %p196 = scmp.eq.s32.totalorder %s22, 1
      %p197 = por %p195, %p196
      %p198 = scmp.ne.s32.totalorder %s187, %s188
      %p199 = scmp.eq.s32.totalorder %s22, 0
      %p200 = por %p198, %p199
      %p201 = scmp.ne.s32.totalorder %s187, %s188
      %p202 = scmp.eq.s32.totalorder %s23, 1
      %p203 = por %p201, %p202
      %p205 = scmp.ne.s32.totalorder %s188, %s204
      %p206 = scmp.eq.s32.totalorder %s23, 0
      %p207 = por %p205, %p206
      %p208 = scmp.le.s32.totalorder 1, %s17
      %p209 = scmp.lt.s32.totalorder %s17, 3
      %p210 = pnand %p208, %p209
      %p211 = pneg %p210
      // Predicated region
      $region9: #{tpu_custom_call.1} parent=5 // pred_check
        _
      $region10: #{tpu_custom_call.1} parent=5 // pred_check_branch
        %213 = sbr.rel (%p210) target = $region12
      $region11: #{tpu_custom_call.1} parent=5 // pred_region
        %s214 = ssub.s32 %s17, 1
        // Predicated region
        $region13: #{tpu_custom_call.1} parent=11 // pred_check
          %p215 = pneg %p90
        $region14: #{tpu_custom_call.1} parent=11 // pred_check_branch
          %217 = sbr.rel (%p215) target = $region16
        $region15: #{tpu_custom_call.1} parent=11 // pred_region
          _
        $region16: #{tpu_custom_call.1} parent=11 // pred_fallthru
          _
        // Predicated region
        $region17: #{tpu_custom_call.1} parent=11 // pred_check
          %p218 = pneg %p111
        $region18: #{tpu_custom_call.1} parent=11 // pred_check_branch
          %220 = sbr.rel (%p218) target = $region20
        $region19: #{tpu_custom_call.1} parent=11 // pred_region
          _
        $region20: #{tpu_custom_call.1} parent=11 // pred_fallthru
          _
        // Predicated region
        $region21: #{tpu_custom_call.1} parent=11 // pred_check
          %p221 = pneg %p132
        $region22: #{tpu_custom_call.1} parent=11 // pred_check_branch
          %223 = sbr.rel (%p221) target = $region24
        $region23: #{tpu_custom_call.1} parent=11 // pred_region
          _
        $region24: #{tpu_custom_call.1} parent=11 // pred_fallthru
          _
        // Predicated region
        $region25: #{tpu_custom_call.1} parent=11 // pred_check
          %p224 = pneg %p153
        $region26: #{tpu_custom_call.1} parent=11 // pred_check_branch
          %226 = sbr.rel (%p224) target = $region28
        $region27: #{tpu_custom_call.1} parent=11 // pred_region
          _
        $region28: #{tpu_custom_call.1} parent=11 // pred_fallthru
          _
        // Predicated region
        $region29: #{tpu_custom_call.1} parent=11 // pred_check
          %p227 = pneg %p174
        $region30: #{tpu_custom_call.1} parent=11 // pred_check_branch
          %229 = sbr.rel (%p227) target = $region32
        $region31: #{tpu_custom_call.1} parent=11 // pred_region
          _
        $region32: #{tpu_custom_call.1} parent=11 // pred_fallthru
          _
      $region12: #{tpu_custom_call.1} parent=5 // pred_fallthru
        _
      %p230 = scmp.lt.s32.totalorder %s17, 2
      // Predicated region
      $region33: #{tpu_custom_call.1} parent=5 // pred_check
        %p231 = pneg %p230
      $region34: #{tpu_custom_call.1} parent=5 // pred_check_branch
        %233 = sbr.rel (%p231) target = $region36
      $region35: #{tpu_custom_call.1} parent=5 // pred_region
        // Predicated region
        $region37: #{tpu_custom_call.1} parent=35 // pred_check
          %p234 = pneg %p37
        $region38: #{tpu_custom_call.1} parent=35 // pred_check_branch
          %236 = sbr.rel (%p234) target = $region40
        $region39: #{tpu_custom_call.1} parent=35 // pred_region
          %s237 = smul.u32 64, %s17
          %p238 = scmp.lt.s32.totalorder %s237, 127
          %s239 = scalar_select %p238, %s237, 127
          %s240 = smul.addr %s239, 4
          %s241 = scalar_lea.vmem %s0, %s240
          %s242 = smul.u32 64, %s17
        $region40: #{tpu_custom_call.1} parent=35 // pred_fallthru
          _
        // Predicated region
        $region41: #{tpu_custom_call.1} parent=35 // pred_check
          %p243 = pneg %p63
        $region42: #{tpu_custom_call.1} parent=35 // pred_check_branch
          %245 = sbr.rel (%p243) target = $region44
        $region43: #{tpu_custom_call.1} parent=35 // pred_region
          %s246 = smul.u32 64, %s17
          %p247 = scmp.lt.s32.totalorder %s246, 127
          %s248 = scalar_select %p247, %s246, 127
          %s249 = smul.addr %s248, 4
          %s250 = scalar_lea.vmem %s1, %s249
          %s251 = smul.u32 64, %s17
        $region44: #{tpu_custom_call.1} parent=35 // pred_fallthru
          _
      $region36: #{tpu_custom_call.1} parent=5 // pred_fallthru
        _
      %p252 = scmp.le.s32.totalorder 1, %s17
      %p253 = scmp.lt.s32.totalorder %s17, 3
      %p254 = pnand %p252, %p253
      %p255 = pneg %p254
      // Predicated region
      $region45: #{tpu_custom_call.1} parent=5 // pred_check
        _
      $region46: #{tpu_custom_call.1} parent=5 // pred_check_branch
        %257 = sbr.rel (%p254) target = $region48
      $region47: #{tpu_custom_call.1} parent=5 // pred_region
        %s258 = ssub.s32 %s17, 1
        %s259 = smul.u32 64, %s22
        %p260 = scmp.lt.s32.totalorder %s259, 127
        %s261 = scalar_select %p260, %s259, 127
        %s262 = smul.addr %s261, 4
        %s263 = scalar_lea.vmem %s0, %s262
        %p264 = pneg %p43
        %p265 = pneg %p40
        %s266 = smul.u32 64, %s22
        %p267 = scmp.lt.s32.totalorder %s266, 127
        %s268 = scalar_select %p267, %s266, 127
        %s269 = smul.addr %s268, 4
        %s270 = scalar_lea.vmem %s1, %s269
        %p271 = pneg %p69
        %p272 = pneg %p66
        %p273 = pneg %p90
        %p274 = pneg %p87
        %p275 = pneg %p111
        %p276 = pneg %p108
        %p277 = pneg %p132
        %p278 = pneg %p129
        %p279 = pneg %p153
        %p280 = pneg %p150
        %p281 = pneg %p174
        %p282 = pneg %p171
        %p283 = pneg %p200
        %p284 = pneg %p197
        %s285 = sand.u32 %s187, 1
        %s286 = scalar_lea.sflag [#allocation4], %s285
        %s287 = sand.u32 %s187, 1
        %s288 = smul.addr %s287, 4
        %s289 = scalar_lea.vmem [#allocation3], %s288
        %s290 = smul.u32 64, %s22
        %p291 = scmp.lt.s32.totalorder %s290, 127
        %s292 = scalar_select %p291, %s290, 127
        %s293 = smul.addr %s292, 4
        %s294 = scalar_lea.vmem %s0, %s293
        %s295 = smul.u32 64, %s22
        %s296 = smul.u32 64, %s22
        %p297 = scmp.lt.s32.totalorder %s296, 127
        %s298 = scalar_select %p297, %s296, 127
        %s299 = smul.addr %s298, 4
        %s300 = scalar_lea.vmem %s1, %s299
        %s301 = smul.u32 64, %s22
        %s302 = smul.u32 4, %s22
        %v304 = vld [vmem:[%s2] sm:$0xf]
        %v305 = vld [vmem:[%s2 + $0x4] sm:$0xf]
        %v306 = vld [vmem:[%s2 + $0x8] sm:$0xf]
        %v307 = vld [vmem:[%s2 + $0xc] sm:$0xf]
        %v308 = vld [vmem:[%s294] sm:$0xf]
        %v309 = vld [vmem:[%s294 + $0x4] sm:$0xf]
        %v310 = vld [vmem:[%s294 + $0x8] sm:$0xf]
        %v311 = vld [vmem:[%s294 + $0xc] sm:$0xf]
        %v312 = vld [vmem:[%s294 + $0x10] sm:$0xf]
        %v313 = vld [vmem:[%s294 + $0x14] sm:$0xf]
        %v314 = vld [vmem:[%s294 + $0x18] sm:$0xf]
        %v315 = vld [vmem:[%s294 + $0x1c] sm:$0xf]
        %v316 = vld [vmem:[%s294 + $0x20] sm:$0xf]
        %v317 = vld [vmem:[%s294 + $0x24] sm:$0xf]
        %v318 = vld [vmem:[%s294 + $0x28] sm:$0xf]
        %v319 = vld [vmem:[%s294 + $0x2c] sm:$0xf]
        %v320 = vld [vmem:[%s294 + $0x30] sm:$0xf]
        %v321 = vld [vmem:[%s294 + $0x34] sm:$0xf]
        %v322 = vld [vmem:[%s294 + $0x38] sm:$0xf]
        %v323 = vld [vmem:[%s294 + $0x3c] sm:$0xf]
        %v324 = vld [vmem:[%s294 + $0x40] sm:$0xf]
        %v325 = vld [vmem:[%s294 + $0x44] sm:$0xf]
        %v326 = vld [vmem:[%s294 + $0x48] sm:$0xf]
        %v327 = vld [vmem:[%s294 + $0x4c] sm:$0xf]
        %v328 = vld [vmem:[%s294 + $0x50] sm:$0xf]
        %v329 = vld [vmem:[%s294 + $0x54] sm:$0xf]
        %v330 = vld [vmem:[%s294 + $0x58] sm:$0xf]
        %v331 = vld [vmem:[%s294 + $0x5c] sm:$0xf]
        %v332 = vld [vmem:[%s294 + $0x60] sm:$0xf]
        %v333 = vld [vmem:[%s294 + $0x64] sm:$0xf]
        %v334 = vld [vmem:[%s294 + $0x68] sm:$0xf]
        %v335 = vld [vmem:[%s294 + $0x6c] sm:$0xf]
        %v336 = vld [vmem:[%s294 + $0x70] sm:$0xf]
        %v337 = vld [vmem:[%s294 + $0x74] sm:$0xf]
        %v338 = vld [vmem:[%s294 + $0x78] sm:$0xf]
        %v339 = vld [vmem:[%s294 + $0x7c] sm:$0xf]
        %v340 = vld [vmem:[%s294 + $0x80] sm:$0xf]
        %v341 = vld [vmem:[%s294 + $0x84] sm:$0xf]
        %v342 = vld [vmem:[%s294 + $0x88] sm:$0xf]
        %v343 = vld [vmem:[%s294 + $0x8c] sm:$0xf]
        %v344 = vld [vmem:[%s294 + $0x90] sm:$0xf]
        %v345 = vld [vmem:[%s294 + $0x94] sm:$0xf]
        %v346 = vld [vmem:[%s294 + $0x98] sm:$0xf]
        %v347 = vld [vmem:[%s294 + $0x9c] sm:$0xf]
        %v348 = vld [vmem:[%s294 + $0xa0] sm:$0xf]
        %v349 = vld [vmem:[%s294 + $0xa4] sm:$0xf]
        %v350 = vld [vmem:[%s294 + $0xa8] sm:$0xf]
        %v351 = vld [vmem:[%s294 + $0xac] sm:$0xf]
        %v352 = vld [vmem:[%s294 + $0xb0] sm:$0xf]
        %v353 = vld [vmem:[%s294 + $0xb4] sm:$0xf]
        %v354 = vld [vmem:[%s294 + $0xb8] sm:$0xf]
        %v355 = vld [vmem:[%s294 + $0xbc] sm:$0xf]
        %v356 = vld [vmem:[%s294 + $0xc0] sm:$0xf]
        %v357 = vld [vmem:[%s294 + $0xc4] sm:$0xf]
        %v358 = vld [vmem:[%s294 + $0xc8] sm:$0xf]
        %v359 = vld [vmem:[%s294 + $0xcc] sm:$0xf]
        %v360 = vld [vmem:[%s294 + $0xd0] sm:$0xf]
        %v361 = vld [vmem:[%s294 + $0xd4] sm:$0xf]
        %v362 = vld [vmem:[%s294 + $0xd8] sm:$0xf]
        %v363 = vld [vmem:[%s294 + $0xdc] sm:$0xf]
        %v364 = vld [vmem:[%s294 + $0xe0] sm:$0xf]
        %v365 = vld [vmem:[%s294 + $0xe4] sm:$0xf]
        %v366 = vld [vmem:[%s294 + $0xe8] sm:$0xf]
        %v367 = vld [vmem:[%s294 + $0xec] sm:$0xf]
        %v368 = vld [vmem:[%s294 + $0xf0] sm:$0xf]
        %v369 = vld [vmem:[%s294 + $0xf4] sm:$0xf]
        %v370 = vld [vmem:[%s294 + $0xf8] sm:$0xf]
        %v371 = vld [vmem:[%s294 + $0xfc] sm:$0xf]
        %v372 = vld [vmem:[%s3] sm:$0xf]
        %v373 = vld [vmem:[%s3 + $0x4] sm:$0xf]
        %v374 = vld [vmem:[%s3 + $0x8] sm:$0xf]
        %v375 = vld [vmem:[%s3 + $0xc] sm:$0xf]
        %v376 = vld [vmem:[%s300] sm:$0xf]
        %v377 = vld [vmem:[%s300 + $0x4] sm:$0xf]
        %v378 = vld [vmem:[%s300 + $0x8] sm:$0xf]
        %v379 = vld [vmem:[%s300 + $0xc] sm:$0xf]
        %v380 = vld [vmem:[%s300 + $0x10] sm:$0xf]
        %v381 = vld [vmem:[%s300 + $0x14] sm:$0xf]
        %v382 = vld [vmem:[%s300 + $0x18] sm:$0xf]
        %v383 = vld [vmem:[%s300 + $0x1c] sm:$0xf]
        %v384 = vld [vmem:[%s300 + $0x20] sm:$0xf]
        %v385 = vld [vmem:[%s300 + $0x24] sm:$0xf]
        %v386 = vld [vmem:[%s300 + $0x28] sm:$0xf]
        %v387 = vld [vmem:[%s300 + $0x2c] sm:$0xf]
        %v388 = vld [vmem:[%s300 + $0x30] sm:$0xf]
        %v389 = vld [vmem:[%s300 + $0x34] sm:$0xf]
        %v390 = vld [vmem:[%s300 + $0x38] sm:$0xf]
        %v391 = vld [vmem:[%s300 + $0x3c] sm:$0xf]
        %v392 = vld [vmem:[%s300 + $0x40] sm:$0xf]
        %v393 = vld [vmem:[%s300 + $0x44] sm:$0xf]
        %v394 = vld [vmem:[%s300 + $0x48] sm:$0xf]
        %v395 = vld [vmem:[%s300 + $0x4c] sm:$0xf]
        %v396 = vld [vmem:[%s300 + $0x50] sm:$0xf]
        %v397 = vld [vmem:[%s300 + $0x54] sm:$0xf]
        %v398 = vld [vmem:[%s300 + $0x58] sm:$0xf]
        %v399 = vld [vmem:[%s300 + $0x5c] sm:$0xf]
        %v400 = vld [vmem:[%s300 + $0x60] sm:$0xf]
        %v401 = vld [vmem:[%s300 + $0x64] sm:$0xf]
        %v402 = vld [vmem:[%s300 + $0x68] sm:$0xf]
        %v403 = vld [vmem:[%s300 + $0x6c] sm:$0xf]
        %v404 = vld [vmem:[%s300 + $0x70] sm:$0xf]
        %v405 = vld [vmem:[%s300 + $0x74] sm:$0xf]
        %v406 = vld [vmem:[%s300 + $0x78] sm:$0xf]
        %v407 = vld [vmem:[%s300 + $0x7c] sm:$0xf]
        %v408 = vld [vmem:[%s300 + $0x80] sm:$0xf]
        %v409 = vld [vmem:[%s300 + $0x84] sm:$0xf]
        %v410 = vld [vmem:[%s300 + $0x88] sm:$0xf]
        %v411 = vld [vmem:[%s300 + $0x8c] sm:$0xf]
        %v412 = vld [vmem:[%s300 + $0x90] sm:$0xf]
        %v413 = vld [vmem:[%s300 + $0x94] sm:$0xf]
        %v414 = vld [vmem:[%s300 + $0x98] sm:$0xf]
        %v415 = vld [vmem:[%s300 + $0x9c] sm:$0xf]
        %v416 = vld [vmem:[%s300 + $0xa0] sm:$0xf]
        %v417 = vld [vmem:[%s300 + $0xa4] sm:$0xf]
        %v418 = vld [vmem:[%s300 + $0xa8] sm:$0xf]
        %v419 = vld [vmem:[%s300 + $0xac] sm:$0xf]
        %v420 = vld [vmem:[%s300 + $0xb0] sm:$0xf]
        %v421 = vld [vmem:[%s300 + $0xb4] sm:$0xf]
        %v422 = vld [vmem:[%s300 + $0xb8] sm:$0xf]
        %v423 = vld [vmem:[%s300 + $0xbc] sm:$0xf]
        %v424 = vld [vmem:[%s300 + $0xc0] sm:$0xf]
        %v425 = vld [vmem:[%s300 + $0xc4] sm:$0xf]
        %v426 = vld [vmem:[%s300 + $0xc8] sm:$0xf]
        %v427 = vld [vmem:[%s300 + $0xcc] sm:$0xf]
        %v428 = vld [vmem:[%s300 + $0xd0] sm:$0xf]
        %v429 = vld [vmem:[%s300 + $0xd4] sm:$0xf]
        %v430 = vld [vmem:[%s300 + $0xd8] sm:$0xf]
        %v431 = vld [vmem:[%s300 + $0xdc] sm:$0xf]
        %v432 = vld [vmem:[%s300 + $0xe0] sm:$0xf]
        %v433 = vld [vmem:[%s300 + $0xe4] sm:$0xf]
        %v434 = vld [vmem:[%s300 + $0xe8] sm:$0xf]
        %v435 = vld [vmem:[%s300 + $0xec] sm:$0xf]
        %v436 = vld [vmem:[%s300 + $0xf0] sm:$0xf]
        %v437 = vld [vmem:[%s300 + $0xf4] sm:$0xf]
        %v438 = vld [vmem:[%s300 + $0xf8] sm:$0xf]
        %v439 = vld [vmem:[%s300 + $0xfc] sm:$0xf]
        %v444 = vunpack.c.l.b16 %v372
        %v445 = vunpack.c.l.b16 %v373
        %v446 = vunpack.c.l.b16 %v374
        %v447 = vunpack.c.l.b16 %v375
        %v448 = vpack.c.b16 %v445, %v444
        %v449 = vpack.c.b16 %v447, %v446
        %v514 = vunpack.c.l.b16 %v376
        %v515 = vunpack.c.l.b16 %v377
        %v516 = vunpack.c.l.b16 %v378
        %v517 = vunpack.c.l.b16 %v379
        %v518 = vunpack.c.l.b16 %v380
        %v519 = vunpack.c.l.b16 %v381
        %v520 = vunpack.c.l.b16 %v382
        %v521 = vunpack.c.l.b16 %v383
        %v522 = vunpack.c.l.b16 %v384
        %v523 = vunpack.c.l.b16 %v385
        %v524 = vunpack.c.l.b16 %v386
        %v525 = vunpack.c.l.b16 %v387
        %v526 = vunpack.c.l.b16 %v388
        %v527 = vunpack.c.l.b16 %v389
        %v528 = vunpack.c.l.b16 %v390
        %v529 = vunpack.c.l.b16 %v391
        %v530 = vunpack.c.l.b16 %v392
        %v531 = vunpack.c.l.b16 %v393
        %v532 = vunpack.c.l.b16 %v394
        %v533 = vunpack.c.l.b16 %v395
        %v534 = vunpack.c.l.b16 %v396
        %v535 = vunpack.c.l.b16 %v397
        %v536 = vunpack.c.l.b16 %v398
        %v537 = vunpack.c.l.b16 %v399
        %v538 = vunpack.c.l.b16 %v400
        %v539 = vunpack.c.l.b16 %v401
        %v540 = vunpack.c.l.b16 %v402
        %v541 = vunpack.c.l.b16 %v403
        %v542 = vunpack.c.l.b16 %v404
        %v543 = vunpack.c.l.b16 %v405
        %v544 = vunpack.c.l.b16 %v406
        %v545 = vunpack.c.l.b16 %v407
        %v546 = vunpack.c.l.b16 %v408
        %v547 = vunpack.c.l.b16 %v409
        %v548 = vunpack.c.l.b16 %v410
        %v549 = vunpack.c.l.b16 %v411
        %v550 = vunpack.c.l.b16 %v412
        %v551 = vunpack.c.l.b16 %v413
        %v552 = vunpack.c.l.b16 %v414
        %v553 = vunpack.c.l.b16 %v415
        %v554 = vunpack.c.l.b16 %v416
        %v555 = vunpack.c.l.b16 %v417
        %v556 = vunpack.c.l.b16 %v418
        %v557 = vunpack.c.l.b16 %v419
        %v558 = vunpack.c.l.b16 %v420
        %v559 = vunpack.c.l.b16 %v421
        %v560 = vunpack.c.l.b16 %v422
        %v561 = vunpack.c.l.b16 %v423
        %v562 = vunpack.c.l.b16 %v424
        %v563 = vunpack.c.l.b16 %v425
        %v564 = vunpack.c.l.b16 %v426
        %v565 = vunpack.c.l.b16 %v427
        %v566 = vunpack.c.l.b16 %v428
        %v567 = vunpack.c.l.b16 %v429
        %v568 = vunpack.c.l.b16 %v430
        %v569 = vunpack.c.l.b16 %v431
        %v570 = vunpack.c.l.b16 %v432
        %v571 = vunpack.c.l.b16 %v433
        %v572 = vunpack.c.l.b16 %v434
        %v573 = vunpack.c.l.b16 %v435
        %v574 = vunpack.c.l.b16 %v436
        %v575 = vunpack.c.l.b16 %v437
        %v576 = vunpack.c.l.b16 %v438
        %v577 = vunpack.c.l.b16 %v439
        %v578 = vpack.c.b16 %v515, %v514
        %v579 = vpack.c.b16 %v517, %v516
        %v580 = vpack.c.b16 %v519, %v518
        %v581 = vpack.c.b16 %v521, %v520
        %v582 = vpack.c.b16 %v523, %v522
        %v583 = vpack.c.b16 %v525, %v524
        %v584 = vpack.c.b16 %v527, %v526
        %v585 = vpack.c.b16 %v529, %v528
        %v586 = vpack.c.b16 %v531, %v530
        %v587 = vpack.c.b16 %v533, %v532
        %v588 = vpack.c.b16 %v535, %v534
        %v589 = vpack.c.b16 %v537, %v536
        %v590 = vpack.c.b16 %v539, %v538
        %v591 = vpack.c.b16 %v541, %v540
        %v592 = vpack.c.b16 %v543, %v542
        %v593 = vpack.c.b16 %v545, %v544
        %v594 = vpack.c.b16 %v547, %v546
        %v595 = vpack.c.b16 %v549, %v548
        %v596 = vpack.c.b16 %v551, %v550
        %v597 = vpack.c.b16 %v553, %v552
        %v598 = vpack.c.b16 %v555, %v554
        %v599 = vpack.c.b16 %v557, %v556
        %v600 = vpack.c.b16 %v559, %v558
        %v601 = vpack.c.b16 %v561, %v560
        %v602 = vpack.c.b16 %v563, %v562
        %v603 = vpack.c.b16 %v565, %v564
        %v604 = vpack.c.b16 %v567, %v566
        %v605 = vpack.c.b16 %v569, %v568
        %v606 = vpack.c.b16 %v571, %v570
        %v607 = vpack.c.b16 %v573, %v572
        %v608 = vpack.c.b16 %v575, %v574
        %v609 = vpack.c.b16 %v577, %v576
        %vm610 = vcmask 261120
        %v612 = vsel %vm610, %v448, 0
        %v615 = vsel %vm610, %v449, 0
        %v618 = vsel %vm610, %v578, 0
        %v621 = vsel %vm610, %v579, 0
        %v624 = vsel %vm610, %v580, 0
        %v627 = vsel %vm610, %v581, 0
        %v630 = vsel %vm610, %v582, 0
        %v633 = vsel %vm610, %v583, 0
        %v636 = vsel %vm610, %v584, 0
        %v639 = vsel %vm610, %v585, 0
        %v642 = vsel %vm610, %v586, 0
        %v645 = vsel %vm610, %v587, 0
        %v648 = vsel %vm610, %v588, 0
        %v651 = vsel %vm610, %v589, 0
        %v654 = vsel %vm610, %v590, 0
        %v657 = vsel %vm610, %v591, 0
        %v660 = vsel %vm610, %v592, 0
        %v663 = vsel %vm610, %v593, 0
        %v666 = vsel %vm610, %v594, 0
        %v669 = vsel %vm610, %v595, 0
        %v672 = vsel %vm610, %v596, 0
        %v675 = vsel %vm610, %v597, 0
        %v678 = vsel %vm610, %v598, 0
        %v681 = vsel %vm610, %v599, 0
        %v684 = vsel %vm610, %v600, 0
        %v687 = vsel %vm610, %v601, 0
        %v690 = vsel %vm610, %v602, 0
        %v693 = vsel %vm610, %v603, 0
        %v696 = vsel %vm610, %v604, 0
        %v699 = vsel %vm610, %v605, 0
        %v702 = vsel %vm610, %v606, 0
        %v705 = vsel %vm610, %v607, 0
        %v708 = vsel %vm610, %v608, 0
        %v711 = vsel %vm610, %v609, 0
        %713 = vmatprep.subr.bf16.mxu0 0
        %714 = vmatpush1.bf16.xpose.msra.mxu0 %v639
        %715 = vmatprep.subr.bf16.mxu0 0
        %716 = vmatpush1.bf16.xpose.msra.mxu0 %v636
        %717 = vmatprep.subr.bf16.mxu0 0
        %718 = vmatpush1.bf16.xpose.msra.mxu0 %v633
        %719 = vmatprep.subr.bf16.mxu0 0
        %720 = vmatpush1.bf16.xpose.msra.mxu0 %v630
        %721 = vmatprep.subr.bf16.mxu0 0
        %722 = vmatpush1.bf16.xpose.msra.mxu0 %v627
        %723 = vmatprep.subr.bf16.mxu0 0
        %724 = vmatpush1.bf16.xpose.msra.mxu0 %v624
        %725 = vmatprep.subr.bf16.mxu0 0
        %726 = vmatpush1.bf16.xpose.msra.mxu0 %v621
        %727 = vmatprep.subr.bf16.mxu0 0
        %728 = vmatpush1.bf16.xpose.msra.mxu0 %v618
        %729 = vmatprep.subr.bf16.mxu0 0
        %730 = vmatpush2.bf16.xpose.msra.mxu0 %v663
        %731 = vmatprep.subr.bf16.mxu0 0
        %732 = vmatpush2.bf16.xpose.msra.mxu0 %v660
        %733 = vmatprep.subr.bf16.mxu0 0
        %734 = vmatpush2.bf16.xpose.msra.mxu0 %v657
        %735 = vmatprep.subr.bf16.mxu0 0
        %736 = vmatpush2.bf16.xpose.msra.mxu0 %v654
        %737 = vmatprep.subr.bf16.mxu0 0
        %738 = vmatpush2.bf16.xpose.msra.mxu0 %v651
        %739 = vmatprep.subr.bf16.mxu0 0
        %740 = vmatpush2.bf16.xpose.msra.mxu0 %v648
        %741 = vmatprep.subr.bf16.mxu0 0
        %742 = vmatpush2.bf16.xpose.msra.mxu0 %v645
        %743 = vmatprep.subr.bf16.mxu0 0
        %744 = vmatpush2.bf16.xpose.msra.mxu0 %v642
        %745 = vmatprep.mubr.bf16.mxu0 0
        %746 = vmatmul.mubr.bf16.gmra.mxu0 %v612
        %v747 = vpop.f32.mrf.mxu0
        %v748 = vadd.f32 0.0, %v747
        %v749 = vpop.f32.mrf.mxu0
        %v750 = vadd.f32 0.0, %v749
        %v751 = vpop.f32.mrf.mxu0
        %v752 = vadd.f32 0.0, %v751
        %v753 = vpop.f32.mrf.mxu0
        %v754 = vadd.f32 0.0, %v753
        %755 = vmatprep.mubr.bf16.mxu0 0
        %756 = vmatmul.mubr.bf16.gmra.mxu0 %v615
        %v757 = vpop.f32.mrf.mxu0
        %v758 = vadd.f32 0.0, %v757
        %v759 = vpop.f32.mrf.mxu0
        %v760 = vadd.f32 0.0, %v759
        %v761 = vpop.f32.mrf.mxu0
        %v762 = vadd.f32 0.0, %v761
        %v763 = vpop.f32.mrf.mxu0
        %v764 = vadd.f32 0.0, %v763
        %765 = vdwg.mxu0
        %766 = vmatprep.subr.bf16.mxu0 0
        %767 = vmatpush1.bf16.xpose.msra.mxu0 %v687
        %768 = vmatprep.subr.bf16.mxu0 0
        %769 = vmatpush1.bf16.xpose.msra.mxu0 %v684
        %770 = vmatprep.subr.bf16.mxu0 0
        %771 = vmatpush1.bf16.xpose.msra.mxu0 %v681
        %772 = vmatprep.subr.bf16.mxu0 0
        %773 = vmatpush1.bf16.xpose.msra.mxu0 %v678
        %774 = vmatprep.subr.bf16.mxu0 0
        %775 = vmatpush1.bf16.xpose.msra.mxu0 %v675
        %776 = vmatprep.subr.bf16.mxu0 0
        %777 = vmatpush1.bf16.xpose.msra.mxu0 %v672
        %778 = vmatprep.subr.bf16.mxu0 0
        %779 = vmatpush1.bf16.xpose.msra.mxu0 %v669
        %780 = vmatprep.subr.bf16.mxu0 0
        %781 = vmatpush1.bf16.xpose.msra.mxu0 %v666
        %782 = vmatprep.subr.bf16.mxu0 0
        %783 = vmatpush2.bf16.xpose.msra.mxu0 %v711
        %784 = vmatprep.subr.bf16.mxu0 0
        %785 = vmatpush2.bf16.xpose.msra.mxu0 %v708
        %786 = vmatprep.subr.bf16.mxu0 0
        %787 = vmatpush2.bf16.xpose.msra.mxu0 %v705
        %788 = vmatprep.subr.bf16.mxu0 0
        %789 = vmatpush2.bf16.xpose.msra.mxu0 %v702
        %790 = vmatprep.subr.bf16.mxu0 0
        %791 = vmatpush2.bf16.xpose.msra.mxu0 %v699
        %792 = vmatprep.subr.bf16.mxu0 0
        %793 = vmatpush2.bf16.xpose.msra.mxu0 %v696
        %794 = vmatprep.subr.bf16.mxu0 0
        %795 = vmatpush2.bf16.xpose.msra.mxu0 %v693
        %796 = vmatprep.subr.bf16.mxu0 0
        %797 = vmatpush2.bf16.xpose.msra.mxu0 %v690
        %798 = vmatprep.mubr.bf16.mxu0 0
        %799 = vmatmul.mubr.bf16.gmra.mxu0 %v612
        %v800 = vpop.f32.mrf.mxu0
        %v801 = vadd.f32 0.0, %v800
        %v802 = vpop.f32.mrf.mxu0
        %v803 = vadd.f32 0.0, %v802
        %v804 = vpop.f32.mrf.mxu0
        %v805 = vadd.f32 0.0, %v804
        %v806 = vpop.f32.mrf.mxu0
        %v807 = vadd.f32 0.0, %v806
        %808 = vmatprep.mubr.bf16.mxu0 0
        %809 = vmatmul.mubr.bf16.gmra.mxu0 %v615
        %v810 = vpop.f32.mrf.mxu0
        %v811 = vadd.f32 0.0, %v810
        %v812 = vpop.f32.mrf.mxu0
        %v813 = vadd.f32 0.0, %v812
        %v814 = vpop.f32.mrf.mxu0
        %v815 = vadd.f32 0.0, %v814
        %v816 = vpop.f32.mrf.mxu0
        %v817 = vadd.f32 0.0, %v816
        %818 = vdwg.mxu0
        %v823 = vunpack.c.l.b16 %v304
        %v824 = vunpack.c.l.b16 %v305
        %v825 = vunpack.c.l.b16 %v306
        %v826 = vunpack.c.l.b16 %v307
        %v827 = vpack.c.b16 %v824, %v823
        %v828 = vpack.c.b16 %v826, %v825
        %v893 = vunpack.c.l.b16 %v308
        %v894 = vunpack.c.l.b16 %v309
        %v895 = vunpack.c.l.b16 %v310
        %v896 = vunpack.c.l.b16 %v311
        %v897 = vunpack.c.l.b16 %v312
        %v898 = vunpack.c.l.b16 %v313
        %v899 = vunpack.c.l.b16 %v314
        %v900 = vunpack.c.l.b16 %v315
        %v901 = vunpack.c.l.b16 %v316
        %v902 = vunpack.c.l.b16 %v317
        %v903 = vunpack.c.l.b16 %v318
        %v904 = vunpack.c.l.b16 %v319
        %v905 = vunpack.c.l.b16 %v320
        %v906 = vunpack.c.l.b16 %v321
        %v907 = vunpack.c.l.b16 %v322
        %v908 = vunpack.c.l.b16 %v323
        %v909 = vunpack.c.l.b16 %v324
        %v910 = vunpack.c.l.b16 %v325
        %v911 = vunpack.c.l.b16 %v326
        %v912 = vunpack.c.l.b16 %v327
        %v913 = vunpack.c.l.b16 %v328
        %v914 = vunpack.c.l.b16 %v329
        %v915 = vunpack.c.l.b16 %v330
        %v916 = vunpack.c.l.b16 %v331
        %v917 = vunpack.c.l.b16 %v332
        %v918 = vunpack.c.l.b16 %v333
        %v919 = vunpack.c.l.b16 %v334
        %v920 = vunpack.c.l.b16 %v335
        %v921 = vunpack.c.l.b16 %v336
        %v922 = vunpack.c.l.b16 %v337
        %v923 = vunpack.c.l.b16 %v338
        %v924 = vunpack.c.l.b16 %v339
        %v925 = vunpack.c.l.b16 %v340
        %v926 = vunpack.c.l.b16 %v341
        %v927 = vunpack.c.l.b16 %v342
        %v928 = vunpack.c.l.b16 %v343
        %v929 = vunpack.c.l.b16 %v344
        %v930 = vunpack.c.l.b16 %v345
        %v931 = vunpack.c.l.b16 %v346
        %v932 = vunpack.c.l.b16 %v347
        %v933 = vunpack.c.l.b16 %v348
        %v934 = vunpack.c.l.b16 %v349
        %v935 = vunpack.c.l.b16 %v350
        %v936 = vunpack.c.l.b16 %v351
        %v937 = vunpack.c.l.b16 %v352
        %v938 = vunpack.c.l.b16 %v353
        %v939 = vunpack.c.l.b16 %v354
        %v940 = vunpack.c.l.b16 %v355
        %v941 = vunpack.c.l.b16 %v356
        %v942 = vunpack.c.l.b16 %v357
        %v943 = vunpack.c.l.b16 %v358
        %v944 = vunpack.c.l.b16 %v359
        %v945 = vunpack.c.l.b16 %v360
        %v946 = vunpack.c.l.b16 %v361
        %v947 = vunpack.c.l.b16 %v362
        %v948 = vunpack.c.l.b16 %v363
        %v949 = vunpack.c.l.b16 %v364
        %v950 = vunpack.c.l.b16 %v365
        %v951 = vunpack.c.l.b16 %v366
        %v952 = vunpack.c.l.b16 %v367
        %v953 = vunpack.c.l.b16 %v368
        %v954 = vunpack.c.l.b16 %v369
        %v955 = vunpack.c.l.b16 %v370
        %v956 = vunpack.c.l.b16 %v371
        %v957 = vpack.c.b16 %v894, %v893
        %v958 = vpack.c.b16 %v896, %v895
        %v959 = vpack.c.b16 %v898, %v897
        %v960 = vpack.c.b16 %v900, %v899
        %v961 = vpack.c.b16 %v902, %v901
        %v962 = vpack.c.b16 %v904, %v903
        %v963 = vpack.c.b16 %v906, %v905
        %v964 = vpack.c.b16 %v908, %v907
        %v965 = vpack.c.b16 %v910, %v909
        %v966 = vpack.c.b16 %v912, %v911
        %v967 = vpack.c.b16 %v914, %v913
        %v968 = vpack.c.b16 %v916, %v915
        %v969 = vpack.c.b16 %v918, %v917
        %v970 = vpack.c.b16 %v920, %v919
        %v971 = vpack.c.b16 %v922, %v921
        %v972 = vpack.c.b16 %v924, %v923
        %v973 = vpack.c.b16 %v926, %v925
        %v974 = vpack.c.b16 %v928, %v927
        %v975 = vpack.c.b16 %v930, %v929
        %v976 = vpack.c.b16 %v932, %v931
        %v977 = vpack.c.b16 %v934, %v933
        %v978 = vpack.c.b16 %v936, %v935
        %v979 = vpack.c.b16 %v938, %v937
        %v980 = vpack.c.b16 %v940, %v939
        %v981 = vpack.c.b16 %v942, %v941
        %v982 = vpack.c.b16 %v944, %v943
        %v983 = vpack.c.b16 %v946, %v945
        %v984 = vpack.c.b16 %v948, %v947
        %v985 = vpack.c.b16 %v950, %v949
        %v986 = vpack.c.b16 %v952, %v951
        %v987 = vpack.c.b16 %v954, %v953
        %v988 = vpack.c.b16 %v956, %v955
        %v990 = vsel %vm610, %v827, 0
        %v993 = vsel %vm610, %v828, 0
        %v996 = vsel %vm610, %v957, 0
        %v999 = vsel %vm610, %v958, 0
        %v1002 = vsel %vm610, %v959, 0
        %v1005 = vsel %vm610, %v960, 0
        %v1008 = vsel %vm610, %v961, 0
        %v1011 = vsel %vm610, %v962, 0
        %v1014 = vsel %vm610, %v963, 0
        %v1017 = vsel %vm610, %v964, 0
        %v1020 = vsel %vm610, %v965, 0
        %v1023 = vsel %vm610, %v966, 0
        %v1026 = vsel %vm610, %v967, 0
        %v1029 = vsel %vm610, %v968, 0
        %v1032 = vsel %vm610, %v969, 0
        %v1035 = vsel %vm610, %v970, 0
        %v1038 = vsel %vm610, %v971, 0
        %v1041 = vsel %vm610, %v972, 0
        %v1044 = vsel %vm610, %v973, 0
        %v1047 = vsel %vm610, %v974, 0
        %v1050 = vsel %vm610, %v975, 0
        %v1053 = vsel %vm610, %v976, 0
        %v1056 = vsel %vm610, %v977, 0
        %v1059 = vsel %vm610, %v978, 0
        %v1062 = vsel %vm610, %v979, 0
        %v1065 = vsel %vm610, %v980, 0
        %v1068 = vsel %vm610, %v981, 0
        %v1071 = vsel %vm610, %v982, 0
        %v1074 = vsel %vm610, %v983, 0
        %v1077 = vsel %vm610, %v984, 0
        %v1080 = vsel %vm610, %v985, 0
        %v1083 = vsel %vm610, %v986, 0
        %v1086 = vsel %vm610, %v987, 0
        %v1089 = vsel %vm610, %v988, 0
        %1091 = vmatprep.subr.bf16.mxu0 0
        %1092 = vmatpush1.bf16.xpose.msra.mxu0 %v1017
        %1093 = vmatprep.subr.bf16.mxu0 0
        %1094 = vmatpush1.bf16.xpose.msra.mxu0 %v1014
        %1095 = vmatprep.subr.bf16.mxu0 0
        %1096 = vmatpush1.bf16.xpose.msra.mxu0 %v1011
        %1097 = vmatprep.subr.bf16.mxu0 0
        %1098 = vmatpush1.bf16.xpose.msra.mxu0 %v1008
        %1099 = vmatprep.subr.bf16.mxu0 0
        %1100 = vmatpush1.bf16.xpose.msra.mxu0 %v1005
        %1101 = vmatprep.subr.bf16.mxu0 0
        %1102 = vmatpush1.bf16.xpose.msra.mxu0 %v1002
        %1103 = vmatprep.subr.bf16.mxu0 0
        %1104 = vmatpush1.bf16.xpose.msra.mxu0 %v999
        %1105 = vmatprep.subr.bf16.mxu0 0
        %1106 = vmatpush1.bf16.xpose.msra.mxu0 %v996
        %1107 = vmatprep.subr.bf16.mxu0 0
        %1108 = vmatpush2.bf16.xpose.msra.mxu0 %v1041
        %1109 = vmatprep.subr.bf16.mxu0 0
        %1110 = vmatpush2.bf16.xpose.msra.mxu0 %v1038
        %1111 = vmatprep.subr.bf16.mxu0 0
        %1112 = vmatpush2.bf16.xpose.msra.mxu0 %v1035
        %1113 = vmatprep.subr.bf16.mxu0 0
        %1114 = vmatpush2.bf16.xpose.msra.mxu0 %v1032
        %1115 = vmatprep.subr.bf16.mxu0 0
        %1116 = vmatpush2.bf16.xpose.msra.mxu0 %v1029
        %1117 = vmatprep.subr.bf16.mxu0 0
        %1118 = vmatpush2.bf16.xpose.msra.mxu0 %v1026
        %1119 = vmatprep.subr.bf16.mxu0 0
        %1120 = vmatpush2.bf16.xpose.msra.mxu0 %v1023
        %1121 = vmatprep.subr.bf16.mxu0 0
        %1122 = vmatpush2.bf16.xpose.msra.mxu0 %v1020
        %1123 = vmatprep.mubr.bf16.mxu0 0
        %1124 = vmatmul.mubr.bf16.gmra.mxu0 %v990
        %v1125 = vpop.f32.mrf.mxu0
        %v1126 = vadd.f32 %v748, %v1125
        %v1127 = vpop.f32.mrf.mxu0
        %v1128 = vadd.f32 %v750, %v1127
        %v1129 = vpop.f32.mrf.mxu0
        %v1130 = vadd.f32 %v752, %v1129
        %v1131 = vpop.f32.mrf.mxu0
        %v1132 = vadd.f32 %v754, %v1131
        %1133 = vmatprep.mubr.bf16.mxu0 0
        %1134 = vmatmul.mubr.bf16.gmra.mxu0 %v993
        %v1135 = vpop.f32.mrf.mxu0
        %v1136 = vadd.f32 %v758, %v1135
        %v1137 = vpop.f32.mrf.mxu0
        %v1138 = vadd.f32 %v760, %v1137
        %v1139 = vpop.f32.mrf.mxu0
        %v1140 = vadd.f32 %v762, %v1139
        %v1141 = vpop.f32.mrf.mxu0
        %v1142 = vadd.f32 %v764, %v1141
        %1143 = vdwg.mxu0
        %1144 = vmatprep.subr.bf16.mxu0 0
        %1145 = vmatpush1.bf16.xpose.msra.mxu0 %v1065
        %1146 = vmatprep.subr.bf16.mxu0 0
        %1147 = vmatpush1.bf16.xpose.msra.mxu0 %v1062
        %1148 = vmatprep.subr.bf16.mxu0 0
        %1149 = vmatpush1.bf16.xpose.msra.mxu0 %v1059
        %1150 = vmatprep.subr.bf16.mxu0 0
        %1151 = vmatpush1.bf16.xpose.msra.mxu0 %v1056
        %1152 = vmatprep.subr.bf16.mxu0 0
        %1153 = vmatpush1.bf16.xpose.msra.mxu0 %v1053
        %1154 = vmatprep.subr.bf16.mxu0 0
        %1155 = vmatpush1.bf16.xpose.msra.mxu0 %v1050
        %1156 = vmatprep.subr.bf16.mxu0 0
        %1157 = vmatpush1.bf16.xpose.msra.mxu0 %v1047
        %1158 = vmatprep.subr.bf16.mxu0 0
        %1159 = vmatpush1.bf16.xpose.msra.mxu0 %v1044
        %1160 = vmatprep.subr.bf16.mxu0 0
        %1161 = vmatpush2.bf16.xpose.msra.mxu0 %v1089
        %1162 = vmatprep.subr.bf16.mxu0 0
        %1163 = vmatpush2.bf16.xpose.msra.mxu0 %v1086
        %1164 = vmatprep.subr.bf16.mxu0 0
        %1165 = vmatpush2.bf16.xpose.msra.mxu0 %v1083
        %1166 = vmatprep.subr.bf16.mxu0 0
        %1167 = vmatpush2.bf16.xpose.msra.mxu0 %v1080
        %1168 = vmatprep.subr.bf16.mxu0 0
        %1169 = vmatpush2.bf16.xpose.msra.mxu0 %v1077
        %1170 = vmatprep.subr.bf16.mxu0 0
        %1171 = vmatpush2.bf16.xpose.msra.mxu0 %v1074
        %1172 = vmatprep.subr.bf16.mxu0 0
        %1173 = vmatpush2.bf16.xpose.msra.mxu0 %v1071
        %1174 = vmatprep.subr.bf16.mxu0 0
        %1175 = vmatpush2.bf16.xpose.msra.mxu0 %v1068
        %1176 = vmatprep.mubr.bf16.mxu0 0
        %1177 = vmatmul.mubr.bf16.gmra.mxu0 %v990
        %v1178 = vpop.f32.mrf.mxu0
        %v1179 = vadd.f32 %v801, %v1178
        %v1180 = vpop.f32.mrf.mxu0
        %v1181 = vadd.f32 %v803, %v1180
        %v1182 = vpop.f32.mrf.mxu0
        %v1183 = vadd.f32 %v805, %v1182
        %v1184 = vpop.f32.mrf.mxu0
        %v1185 = vadd.f32 %v807, %v1184
        %1186 = vmatprep.mubr.bf16.mxu0 0
        %1187 = vmatmul.mubr.bf16.gmra.mxu0 %v993
        %v1188 = vpop.f32.mrf.mxu0
        %v1189 = vadd.f32 %v811, %v1188
        %v1190 = vpop.f32.mrf.mxu0
        %v1191 = vadd.f32 %v813, %v1190
        %v1192 = vpop.f32.mrf.mxu0
        %v1193 = vadd.f32 %v815, %v1192
        %v1194 = vpop.f32.mrf.mxu0
        %v1195 = vadd.f32 %v817, %v1194
        %1196 = vdwg.mxu0
        %v1197 = vld [vmem:[%s4] sm:$0xff]
        %v1198 = vld [vmem:[%s4 + $0x8] sm:$0xff]
        %v1199 = vld [vmem:[%s4 + $0x10] sm:$0xff]
        %v1200 = vld [vmem:[%s4 + $0x18] sm:$0xff]
        %1202 = vset.pattern.permute.xlu0 0
        %1203 = vperm.xlu0 %1202, %v1197
        %v1204 = vpop.permute.xlu0 %1203
        %1207 = vset.pattern.permute.xlu0 0
        %1208 = vperm.xlu0 %1207, %v1198
        %v1209 = vpop.permute.xlu0 %1208
        %1212 = vset.pattern.permute.xlu0 0
        %1213 = vperm.xlu0 %1212, %v1199
        %v1214 = vpop.permute.xlu0 %1213
        %1217 = vset.pattern.permute.xlu0 0
        %1218 = vperm.xlu0 %1217, %v1200
        %v1219 = vpop.permute.xlu0 %1218
        %v1221 = vadd.f32 %v1126, %v1204
        %v1222 = vadd.f32 %v1128, %v1204
        %v1223 = vadd.f32 %v1179, %v1204
        %v1224 = vadd.f32 %v1181, %v1204
        %v1225 = vadd.f32 %v1130, %v1209
        %v1226 = vadd.f32 %v1132, %v1209
        %v1227 = vadd.f32 %v1183, %v1209
        %v1228 = vadd.f32 %v1185, %v1209
        %v1229 = vadd.f32 %v1136, %v1214
        %v1230 = vadd.f32 %v1138, %v1214
        %v1231 = vadd.f32 %v1189, %v1214
        %v1232 = vadd.f32 %v1191, %v1214
        %v1233 = vadd.f32 %v1140, %v1219
        %v1234 = vadd.f32 %v1142, %v1219
        %v1235 = vadd.f32 %v1193, %v1219
        %v1236 = vadd.f32 %v1195, %v1219
        %v1237 = vmax.f32 %v1221, 0.0
        %v1238 = vmax.f32 %v1222, 0.0
        %v1239 = vmax.f32 %v1223, 0.0
        %v1240 = vmax.f32 %v1224, 0.0
        %v1241 = vmax.f32 %v1225, 0.0
        %v1242 = vmax.f32 %v1226, 0.0
        %v1243 = vmax.f32 %v1227, 0.0
        %v1244 = vmax.f32 %v1228, 0.0
        %v1245 = vmax.f32 %v1229, 0.0
        %v1246 = vmax.f32 %v1230, 0.0
        %v1247 = vmax.f32 %v1231, 0.0
        %v1248 = vmax.f32 %v1232, 0.0
        %v1249 = vmax.f32 %v1233, 0.0
        %v1250 = vmax.f32 %v1234, 0.0
        %v1251 = vmax.f32 %v1235, 0.0
        %v1252 = vmax.f32 %v1236, 0.0
        %v1253 = vld [vmem:[%s5] sm:$0x1]
        %s1254 = sld [smem:[#allocation2]]
        %v1255 = vstv %s1254
        %v1257 = vsel %vm610, %v1253, 0
        %1259 = vmatprep.subr.mxu0 0.0
        %1260 = vmatpush1.msra.mxu0 0.0
        %1261 = vmatprep.subr.mxu0 0.0
        %1262 = vmatpush1.msra.mxu0 0.0
        %1263 = vmatprep.subr.mxu0 0.0
        %1264 = vmatpush1.msra.mxu0 0.0
        %1265 = vmatprep.subr.mxu0 0.0
        %1266 = vmatpush1.msra.mxu0 0.0
        %1267 = vmatprep.subr.mxu0 0.0
        %1268 = vmatpush1.msra.mxu0 0.0
        %1269 = vmatprep.subr.mxu0 0.0
        %1270 = vmatpush1.msra.mxu0 0.0
        %1271 = vmatprep.subr.mxu0 0.0
        %1272 = vmatpush1.msra.mxu0 0.0
        %1273 = vmatprep.subr.mxu0 0.0
        %1274 = vmatpush1.msra.mxu0 0.0
        %1275 = vmatprep.subr.mxu0 0.0
        %1276 = vmatpush1.msra.mxu0 0.0
        %1277 = vmatprep.subr.mxu0 0.0
        %1278 = vmatpush1.msra.mxu0 0.0
        %1279 = vmatprep.subr.mxu0 0.0
        %1280 = vmatpush1.msra.mxu0 0.0
        %1281 = vmatprep.subr.mxu0 0.0
        %1282 = vmatpush1.msra.mxu0 0.0
        %1283 = vmatprep.subr.mxu0 %v1250
        %1284 = vmatpush1.msra.mxu0 %v1249
        %1285 = vmatprep.subr.mxu0 %v1246
        %1286 = vmatpush1.msra.mxu0 %v1245
        %1287 = vmatprep.subr.mxu0 %v1242
        %1288 = vmatpush1.msra.mxu0 %v1241
        %1289 = vmatprep.subr.mxu0 %v1238
        %1290 = vmatpush1.msra.mxu0 %v1237
        %1291 = vmatprep.subr.mxu0 0.0
        %1292 = vmatpush2.msra.mxu0 0.0
        %1293 = vmatprep.subr.mxu0 0.0
        %1294 = vmatpush2.msra.mxu0 0.0
        %1295 = vmatprep.subr.mxu0 0.0
        %1296 = vmatpush2.msra.mxu0 0.0
        %1297 = vmatprep.subr.mxu0 0.0
        %1298 = vmatpush2.msra.mxu0 0.0
        %1299 = vmatprep.subr.mxu0 0.0
        %1300 = vmatpush2.msra.mxu0 0.0
        %1301 = vmatprep.subr.mxu0 0.0
        %1302 = vmatpush2.msra.mxu0 0.0
        %1303 = vmatprep.subr.mxu0 0.0
        %1304 = vmatpush2.msra.mxu0 0.0
        %1305 = vmatprep.subr.mxu0 0.0
        %1306 = vmatpush2.msra.mxu0 0.0
        %1307 = vmatprep.subr.mxu0 0.0
        %1308 = vmatpush2.msra.mxu0 0.0
        %1309 = vmatprep.subr.mxu0 0.0
        %1310 = vmatpush2.msra.mxu0 0.0
        %1311 = vmatprep.subr.mxu0 0.0
        %1312 = vmatpush2.msra.mxu0 0.0
        %1313 = vmatprep.subr.mxu0 0.0
        %1314 = vmatpush2.msra.mxu0 0.0
        %1315 = vmatprep.subr.mxu0 0.0
        %1316 = vmatpush2.msra.mxu0 0.0
        %1317 = vmatprep.subr.mxu0 0.0
        %1318 = vmatpush2.msra.mxu0 0.0
        %1319 = vmatprep.subr.mxu0 0.0
        %1320 = vmatpush2.msra.mxu0 0.0
        %1321 = vmatprep.subr.mxu0 0.0
        %1322 = vmatpush2.msra.mxu0 0.0
        %1323 = vmatprep.mubr.f32.mxu0 0.0
        %1324 = vmatmul.mubr.f32.gmra.mxu0 %v1257
        %v1325 = vpop.f32.mrf.mxu0
        %v1326 = vadd.f32 %v1255, %v1325
        %v1327 = vpop.f32.mrf.mxu0
        %v1328 = vadd.f32 %v1255, %v1327
        %1329 = vdwg.mxu0
        %1330 = vmatprep.subr.mxu0 0.0
        %1331 = vmatpush1.msra.mxu0 0.0
        %1332 = vmatprep.subr.mxu0 0.0
        %1333 = vmatpush1.msra.mxu0 0.0
        %1334 = vmatprep.subr.mxu0 0.0
        %1335 = vmatpush1.msra.mxu0 0.0
        %1336 = vmatprep.subr.mxu0 0.0
        %1337 = vmatpush1.msra.mxu0 0.0
        %1338 = vmatprep.subr.mxu0 0.0
        %1339 = vmatpush1.msra.mxu0 0.0
        %1340 = vmatprep.subr.mxu0 0.0
        %1341 = vmatpush1.msra.mxu0 0.0
        %1342 = vmatprep.subr.mxu0 0.0
        %1343 = vmatpush1.msra.mxu0 0.0
        %1344 = vmatprep.subr.mxu0 0.0
        %1345 = vmatpush1.msra.mxu0 0.0
        %1346 = vmatprep.subr.mxu0 0.0
        %1347 = vmatpush1.msra.mxu0 0.0
        %1348 = vmatprep.subr.mxu0 0.0
        %1349 = vmatpush1.msra.mxu0 0.0
        %1350 = vmatprep.subr.mxu0 0.0
        %1351 = vmatpush1.msra.mxu0 0.0
        %1352 = vmatprep.subr.mxu0 0.0
        %1353 = vmatpush1.msra.mxu0 0.0
        %1354 = vmatprep.subr.mxu0 %v1252
        %1355 = vmatpush1.msra.mxu0 %v1251
        %1356 = vmatprep.subr.mxu0 %v1248
        %1357 = vmatpush1.msra.mxu0 %v1247
        %1358 = vmatprep.subr.mxu0 %v1244
        %1359 = vmatpush1.msra.mxu0 %v1243
        %1360 = vmatprep.subr.mxu0 %v1240
        %1361 = vmatpush1.msra.mxu0 %v1239
        %1362 = vmatprep.subr.mxu0 0.0
        %1363 = vmatpush2.msra.mxu0 0.0
        %1364 = vmatprep.subr.mxu0 0.0
        %1365 = vmatpush2.msra.mxu0 0.0
        %1366 = vmatprep.subr.mxu0 0.0
        %1367 = vmatpush2.msra.mxu0 0.0
        %1368 = vmatprep.subr.mxu0 0.0
        %1369 = vmatpush2.msra.mxu0 0.0
        %1370 = vmatprep.subr.mxu0 0.0
        %1371 = vmatpush2.msra.mxu0 0.0
        %1372 = vmatprep.subr.mxu0 0.0
        %1373 = vmatpush2.msra.mxu0 0.0
        %1374 = vmatprep.subr.mxu0 0.0
        %1375 = vmatpush2.msra.mxu0 0.0
        %1376 = vmatprep.subr.mxu0 0.0
        %1377 = vmatpush2.msra.mxu0 0.0
        %1378 = vmatprep.subr.mxu0 0.0
        %1379 = vmatpush2.msra.mxu0 0.0
        %1380 = vmatprep.subr.mxu0 0.0
        %1381 = vmatpush2.msra.mxu0 0.0
        %1382 = vmatprep.subr.mxu0 0.0
        %1383 = vmatpush2.msra.mxu0 0.0
        %1384 = vmatprep.subr.mxu0 0.0
        %1385 = vmatpush2.msra.mxu0 0.0
        %1386 = vmatprep.subr.mxu0 0.0
        %1387 = vmatpush2.msra.mxu0 0.0
        %1388 = vmatprep.subr.mxu0 0.0
        %1389 = vmatpush2.msra.mxu0 0.0
        %1390 = vmatprep.subr.mxu0 0.0
        %1391 = vmatpush2.msra.mxu0 0.0
        %1392 = vmatprep.subr.mxu0 0.0
        %1393 = vmatpush2.msra.mxu0 0.0
        %1394 = vmatprep.mubr.f32.mxu0 0.0
        %1395 = vmatmul.mubr.f32.gmra.mxu0 %v1257
        %v1396 = vpop.f32.mrf.mxu0
        %v1397 = vadd.f32 %v1255, %v1396
        %v1398 = vpop.f32.mrf.mxu0
        %v1399 = vadd.f32 %v1255, %v1398
        %1400 = vdwg.mxu0
        %v1405 = vcombine.low %v1326, %v1328
        %v1406 = vcombine.low %v1397, %v1399
        %v1408 = vunpack.c.l.s4 1966171168
        %v1409 = vunpack.c.0.s8 %v1408
        %v1410 = vlaneseq
        %v1411 = vshrl.u32 %v1410, 7
        %v1412 = vsub.s32 %v1409, %v1411
        %v1413 = vrot.slane %v1405, %v1412
        %v1415 = vunpack.c.l.s4 1966171168
        %v1416 = vunpack.c.0.s8 %v1415
        %v1417 = vlaneseq
        %v1418 = vshrl.u32 %v1417, 7
        %v1419 = vsub.s32 %v1416, %v1418
        %v1420 = vrot.slane %v1406, %v1419
        %v1421 = vcombine.low %v1413, %v1420
        %v1423 = vunpack.c.l.s4 1966171168
        %v1424 = vunpack.c.0.s8 %v1423
        %v1425 = vlaneseq
        %v1426 = vshrl.u32 %v1425, 7
        %v1427 = vsub.s32 %v1424, %v1426
        %v1428 = vrot.slane %v1421, %v1427
        %v1430 = vlaneseq
        %vm1431 = vcmp.ge.s32.totalorder %v1430, 0
        %vm1432 = vcmp.lt.s32.totalorder %v1430, 512
        %vm1433 = vmand %vm1431, %vm1432
        %1434 = vst.msk [vmem:[%s289] sm:$0xf] %vm1433, %v1428
        %s1435 = sand.u32 %s187, 1
        %s1436 = scalar_lea.sflag [#allocation4], %s1435
        %s1437 = sand.u32 %s187, 1
        %s1438 = smul.addr %s1437, 4
        %s1439 = scalar_lea.vmem [#allocation3], %s1438
        // Predicated region
        $region49: #{tpu_custom_call.1} parent=47 // pred_check
          %p1440 = pneg %p197
        $region50: #{tpu_custom_call.1} parent=47 // pred_check_branch
          %1442 = sbr.rel (%p1440) target = $region52
        $region51: #{tpu_custom_call.1} parent=47 // pred_region
          %s1443 = smul.u32 4, %s22
          %s1445 = ssub.s32 64, 64
          %1446 = vsyncadd %s1436, %s1445
          %s1447 = smul.addr %s1443, 16
          %s1448 = scalar_lea.hbm %s7, %s1447
          %s1450 = sshll.u32 %s1439, 4
          %s1451 = int_to_ptr.vmem [resolvable:$true] %s1450
          %1453 = dma.vmem_to_hbm [thread:$0]  %s1451, 64, %s1448, %s1436
        $region52: #{tpu_custom_call.1} parent=47 // pred_fallthru
          _
      $region48: #{tpu_custom_call.1} parent=5 // pred_fallthru
        _
      %p1454 = scmp.le.s32.totalorder 2, %s17
      // Predicated region
      $region53: #{tpu_custom_call.1} parent=5 // pred_check
        %p1455 = pneg %p1454
      $region54: #{tpu_custom_call.1} parent=5 // pred_check_branch
        %1457 = sbr.rel (%p1455) target = $region56
      $region55: #{tpu_custom_call.1} parent=5 // pred_region
        %s1458 = ssub.s32 %s17, 2
        // Predicated region
        $region57: #{tpu_custom_call.1} parent=55 // pred_check
          %p1459 = pneg %p203
        $region58: #{tpu_custom_call.1} parent=55 // pred_check_branch
          %1461 = sbr.rel (%p1459) target = $region60
        $region59: #{tpu_custom_call.1} parent=55 // pred_region
          %s1462 = sand.u32 %s188, 1
          %s1463 = scalar_lea.sflag [#allocation4], %s1462
          %s1464 = sand.u32 %s188, 1
          %s1465 = smul.addr %s1464, 4
          %s1466 = scalar_lea.vmem [#allocation3], %s1465
          %1467 = dma.done %s1463, 64
        $region60: #{tpu_custom_call.1} parent=55 // pred_fallthru
          _
      $region56: #{tpu_custom_call.1} parent=5 // pred_fallthru
        _
    $region6: #{tpu_custom_call.1} parent=1 // loop_footer
      %s21 = sadd.s32 1, %s17
    $region7: #{tpu_custom_call.1} parent=1 // loop_footer_branch
      %16 = sbr.rel target = $region3
    $region8: #{tpu_custom_call.1} parent=1 // loop_exit
      _
    %1468 = vsyncpa [#allocation4], 1
    %s1469 = scalar_lea.sflag [#allocation4], 1
    %1470 = vsyncpa %s1469, 1

</llo_original>
